<compile_context>
chip_gen: v6e
topology: v6e:2x2x1
jax: 0.10.0
libtpu: 0.0.40
codegen_flags: <defaults>
</compile_context>

<pallas_src>
import functools

import jax
import jax.numpy as jnp
from jax import lax
from jax.experimental import pallas as pl
from jax.experimental.pallas import tpu as pltpu

_EPS = 1e-8


def _round_down(a, b):
    return a // b * b


def _vmem_capacity_bytes():
    # Physical VMEM per TensorCore for this generation (v5e/v6e: 128 MiB,
    # v7x: 64 MiB).  Fall back to the smallest (64 MiB) if the query fails.
    try:
        cap = int(getattr(pltpu.get_tpu_info(), "vmem_capacity_bytes", 0))
        if cap > 0:
            return cap
    except Exception:
        pass
    return 64 * 1024 * 1024


# ----------------- kernel 1: streaming raw-Gram accumulation -----------------

def _gram_kernel(x_ref, gram_ref, colsum_ref, *, n_total, tn, tiles_per_split,
                 cast_bf16):
    s = pl.program_id(0)   # split ("parallel" axis -> one per TensorCore)
    i = pl.program_id(1)   # tile within split ("arbitrary" reduction axis)

    @pl.when(i == 0)
    def _init():
        gram_ref[...] = jnp.zeros_like(gram_ref)
        colsum_ref[...] = jnp.zeros_like(colsum_ref)

    # Global tile index and number of valid rows in this tile.  Tiles past the
    # end of x (ragged tail / split-decomposition overshoot) must contribute
    # nothing: their (undefined) rows are zeroed before the matmul.
    t = s * tiles_per_split + i
    rows_valid = n_total - t * tn

    def _accum(xb):
        lhs = xb.astype(jnp.bfloat16) if cast_bf16 else xb
        # Contract the N (sublane) axis directly (LHS-transposed matmul form).
        # TODO(synk): confirm via pl.lower_as_mlir that Mosaic emits no vxpose
        # for this (0,0)-contraction; if it does, present x pre-transposed.
        gram_ref[...] += lax.dot_general(
            lhs, lhs,
            dimension_numbers=(((0,), (0,)), ((), ())),
            preferred_element_type=jnp.float32)
        colsum_ref[...] += jnp.sum(xb.astype(jnp.float32), axis=0,
                                   keepdims=True)

    @pl.when(rows_valid >= tn)          # common case: full tile, no select cost
    def _full():
        _accum(x_ref[...])

    @pl.when(rows_valid < tn)           # ragged last tile / fully-OOB tile
    def _masked():
        xb = x_ref[...]
        row_ids = lax.broadcasted_iota(jnp.int32, xb.shape, 0)
        xb = jnp.where(row_ids < rows_valid, xb, jnp.zeros_like(xb))
        _accum(xb)


# ------------------------- kernel 2: O(C^2) epilogue -------------------------

def _epilogue_kernel(gram_ref, colsum_ref, o_ref, *, n_total, c):
    n_f = jnp.float32(n_total)
    g = jnp.sum(gram_ref[...], axis=0)            # (C, C) combined raw Gram
    colsum = jnp.sum(colsum_ref[...], axis=0)     # (1, C)

    mu = colsum / n_f                             # (1, C) column means
    rows = lax.broadcasted_iota(jnp.int32, (c, c), 0)
    cols = lax.broadcasted_iota(jnp.int32, (c, c), 1)
    diag_g = jnp.sum(jnp.where(rows == cols, g, 0.0), axis=0, keepdims=True)
    cdiag = diag_g - n_f * mu * mu                # (1, C) diag of centered Gram
    var = cdiag / jnp.float32(n_total - 1)        # unbiased variance (ddof=1)
    w = 1.0 / (_EPS + var)                        # w_j = s_j^2 = 1/(eps+var_j)
    u = w * mu                                    # (1, C)

    def _quad(v, m):                              # v (1,C), m (C,C) -> v m v^T
        y = lax.dot_general(v, m,
                            dimension_numbers=(((1,), (0,)), ((), ())),
                            preferred_element_type=jnp.float32)   # (1, C)
        return jnp.sum(y * v)

    # sum_{jk} corr_jk^2  with  corr = (s s^T) . (G - n mu mu^T):
    t_scalar = jnp.sum(w * mu * mu)
    sum_all = _quad(w, g * g) - 2.0 * n_f * _quad(u, g) + (n_f * t_scalar) ** 2
    diag_sq = jnp.sum((w * cdiag) ** 2)           # sum_j corr_jj^2
    off_sq = sum_all - diag_sq

    loss = off_sq / jnp.float32(c * (c - 1)) / n_f
    o_ref[0, 0] = loss


# ---------------------------------- wrapper ----------------------------------

def feddecorr_loss(x, *, tile_rows=None, n_splits=None, use_bf16_matmul=False):
    """FedDecorrLoss forward.  x: (N, C).  Returns scalar float32."""
    n, c = x.shape
    if n == 1 or c < 2:
        # N==1 matches the PyTorch early return; C<2 is degenerate (no
        # off-diagonal entries) -> return 0 instead of NaN.
        return jnp.float32(0.0)

    itemsize = x.dtype.itemsize
    base = max(8, 32 // itemsize)                 # sublane multiple: 8 f32 / 16 bf16

    # ---- tile size: target ~2 MiB per (tn, C) input tile, multiple of `base`.
    if tile_rows is None:
        target_bytes = 2 * 1024 * 1024
        tile_rows = max(base, _round_down(target_bytes // max(1, c * itemsize),
                                          base))
    tn = max(base, _round_down(int(tile_rows), base))
    if tn >= n:
        tn = n                                    # single full-extent tile
    total_tiles = -(-n // tn)

    # ---- split the N-stream across (up to) 2 TensorCores (v7x / megacore).
    # On 1-TC chips the "parallel" axis serializes; the only cost is one extra
    # C^2 partial Gram (negligible), so this is safe on every generation.
    if n_splits is None:
        n_splits = 2 if total_tiles >= 2 else 1
    n_splits = max(1, min(int(n_splits), total_tiles))
    tiles_per_split = -(-total_tiles // n_splits)
    last_block = total_tiles - 1

    # ---- VMEM budgets, capped below the physical per-core capacity.
    vmem_cap = _vmem_capacity_bytes()
    head = max(vmem_cap - 8 * 1024 * 1024, 16 * 1024 * 1024)
    gram_bytes = c * c * 4
    need_main = 3 * tn * c * itemsize + 2 * gram_bytes + 4 * 8 * max(c, 128)
    vmem_main = int(min(max(2 * need_main, 32 * 1024 * 1024), head))
    need_epi = (2 * n_splits + 3) * gram_bytes + 8 * 8 * max(c, 128)
    vmem_epi = int(min(max(2 * need_epi, 32 * 1024 * 1024), head))
    # TODO(synk): for very large C (f32 Gram no longer fits VMEM, ~C>=1800 on
    # v7x) add a (Ci, Cj) tiling of the Gram output and a row-blocked epilogue.

    cast_bf16 = bool(use_bf16_matmul) and x.dtype == jnp.float32

    gram_kernel = functools.partial(
        _gram_kernel, n_total=n, tn=tn, tiles_per_split=tiles_per_split,
        cast_bf16=cast_bf16)

    def x_index_map(s, i):
        t = s * tiles_per_split + i
        return (jnp.minimum(t, last_block), 0)    # clamp overshoot tiles

    # TODO(synk): pipeline_mode=pl.Buffered(3) on the x spec for the small-C,
    # DMA-latency-exposed regime.
    gram_parts, colsum_parts = pl.pallas_call(
        gram_kernel,
        out_shape=(jax.ShapeDtypeStruct((n_splits, c, c), jnp.float32),
                   jax.ShapeDtypeStruct((n_splits, 1, c), jnp.float32)),
        grid=(n_splits, tiles_per_split),
        in_specs=[pl.BlockSpec((tn, c), x_index_map)],
        out_specs=(pl.BlockSpec((None, c, c), lambda s, i: (s, 0, 0)),
                   pl.BlockSpec((None, 1, c), lambda s, i: (s, 0, 0))),
        compiler_params=pltpu.CompilerParams(
            dimension_semantics=("parallel", "arbitrary"),
            vmem_limit_bytes=vmem_main),
        cost_estimate=pl.CostEstimate(
            flops=2 * n * c * c,
            transcendentals=0,
            bytes_accessed=n * c * itemsize + n_splits * (c * c + c) * 4),
    )(x)

    epi_kernel = functools.partial(_epilogue_kernel, n_total=n, c=c)
    loss = pl.pallas_call(
        epi_kernel,
        out_shape=jax.ShapeDtypeStruct((1, 1), jnp.float32),
        compiler_params=pltpu.CompilerParams(vmem_limit_bytes=vmem_epi),
    )(gram_parts, colsum_parts)
    return loss[0, 0]


# -------------------------------- verification --------------------------------

def _reference(x):
    """Plain-JAX reference mirroring the PyTorch module."""
    x = x.astype(jnp.float32)
    n, c = x.shape
    if n == 1:
        return jnp.float32(0.0)
    x = x - jnp.mean(x, axis=0, keepdims=True)
    var = jnp.var(x, axis=0, keepdims=True, ddof=1)
    x = x / jnp.sqrt(_EPS + var)
    corr = x.T @ x
    mask = ~jnp.eye(c, dtype=bool)
    return jnp.mean(corr[mask] ** 2) / n


if __name__ == "__main__":
    key = jax.random.PRNGKey(0)
    k1, k2, k3 = jax.random.split(key, 3)

    # Case 1: single-tile path (N=8, C=32), f32.
    x1 = jax.random.normal(k1, (8, 32), dtype=jnp.float32)
    loss1 = feddecorr_loss(x1)
    jax.block_until_ready(loss1)
    ref1 = _reference(x1)
    assert jnp.allclose(loss1, ref1, rtol=1e-3, atol=1e-5), (loss1, ref1)

    # Case 2: multi-tile / dual-split / ragged-tail path.
    # N=20, C=32, tn=8 -> 3 real tiles, grid (2, 2): one partially-masked tile
    # and one fully-out-of-range (clamped + masked) tile.
    x2 = jax.random.normal(k2, (20, 32), dtype=jnp.float32)
    loss2 = feddecorr_loss(x2, tile_rows=8)
    jax.block_until_ready(loss2)
    ref2 = _reference(x2)
    assert jnp.allclose(loss2, ref2, rtol=1e-3, atol=1e-5), (loss2, ref2)

    # Case 3: bf16 input (N=64, C=128): bf16 products on the MXU, f32 stats.
    x3 = jax.random.normal(k3, (64, 128), dtype=jnp.float32).astype(jnp.bfloat16)
    loss3 = feddecorr_loss(x3)
    jax.block_until_ready(loss3)
    ref3 = _reference(x3)
    assert jnp.allclose(loss3, ref3, rtol=5e-2, atol=1e-3), (loss3, ref3)

    print("KERNEL_OK")
</pallas_src>

<mosaic_0001>
module attributes {stable_mosaic.version = 11 : i64} {
  func.func @_gram_kernel(%arg0: i32, %arg1: i32, %arg2: memref<8x32xf32, #tpu.memory_space<vmem>>, %arg3: memref<1x32x32xf32, #tpu.memory_space<vmem>>, %arg4: memref<1x1x32xf32, #tpu.memory_space<vmem>>) attributes {dimension_semantics = [#tpu.dimension_semantics<parallel>, #tpu.dimension_semantics<arbitrary>], iteration_bounds = array<i64: 1, 1>, scalar_prefetch = 0 : i64, scratch_operands = 0 : i64, tpu.core_type = #tpu.core_type<tc>, window_params = [{transform_indices = @transform_0, window_bounds = array<i64: 8, 32>}, {transform_indices = @transform_1, window_bounds = array<i64: 1, 32, 32>}, {transform_indices = @transform_2, window_bounds = array<i64: 1, 1, 32>}]} {
    %c0_i32 = arith.constant 0 : i32
    %0 = arith.cmpi eq, %arg1, %c0_i32 : i32
    %1 = arith.extui %0 : i1 to i32
    %c0_i32_0 = arith.constant 0 : i32
    %2 = arith.cmpi ne, %1, %c0_i32_0 : i32
    scf.if %2 {
      %cst = arith.constant 0.000000e+00 : f32
      %13 = vector.broadcast %cst : f32 to vector<32x32xf32>
      %c0 = arith.constant 0 : index
      %c0_6 = arith.constant 0 : index
      %c0_7 = arith.constant 0 : index
      %14 = vector.load %arg3[%c0, %c0_6, %c0_7] : memref<1x32x32xf32, #tpu.memory_space<vmem>>, vector<1x32x32xf32>
      %15 = vector.shape_cast %14 : vector<1x32x32xf32> to vector<32x32xf32>
      %16 = vector.shape_cast %13 : vector<32x32xf32> to vector<1x32x32xf32>
      tpu.vector_store %arg3[%c0, %c0_6, %c0_7], %16 {strides = array<i32>} : memref<1x32x32xf32, #tpu.memory_space<vmem>>, vector<1x32x32xf32>,
      %cst_8 = arith.constant 0.000000e+00 : f32
      %17 = vector.broadcast %cst_8 : f32 to vector<1x32xf32>
      %c0_9 = arith.constant 0 : index
      %c0_10 = arith.constant 0 : index
      %c0_11 = arith.constant 0 : index
      %18 = vector.load %arg4[%c0_9, %c0_10, %c0_11] : memref<1x1x32xf32, #tpu.memory_space<vmem>>, vector<1x1x32xf32>
      %19 = vector.shape_cast %18 : vector<1x1x32xf32> to vector<1x32xf32>
      %20 = vector.shape_cast %17 : vector<1x32xf32> to vector<1x1x32xf32>
      tpu.vector_store %arg4[%c0_9, %c0_10, %c0_11], %20 {strides = array<i32>} : memref<1x1x32xf32, #tpu.memory_space<vmem>>, vector<1x1x32xf32>,
    } else {
    }
    %c1_i32 = arith.constant 1 : i32
    %3 = arith.muli %arg0, %c1_i32 : i32
    %4 = arith.addi %3, %arg1 : i32
    %c8_i32 = arith.constant 8 : i32
    %5 = arith.muli %4, %c8_i32 : i32
    %c8_i32_1 = arith.constant 8 : i32
    %6 = arith.subi %c8_i32_1, %5 : i32
    %c8_i32_2 = arith.constant 8 : i32
    %7 = arith.cmpi sge, %6, %c8_i32_2 : i32
    %8 = arith.extui %7 : i1 to i32
    %c0_i32_3 = arith.constant 0 : i32
    %9 = arith.cmpi ne, %8, %c0_i32_3 : i32
    scf.if %9 {
      %c0 = arith.constant 0 : index
      %c0_6 = arith.constant 0 : index
      %13 = vector.load %arg2[%c0, %c0_6] : memref<8x32xf32, #tpu.memory_space<vmem>>, vector<8x32xf32>
      %c0_7 = arith.constant 0 : index
      %c0_8 = arith.constant 0 : index
      %c0_9 = arith.constant 0 : index
      %14 = vector.load %arg3[%c0_7, %c0_8, %c0_9] : memref<1x32x32xf32, #tpu.memory_space<vmem>>, vector<1x32x32xf32>
      %15 = vector.shape_cast %14 : vector<1x32x32xf32> to vector<32x32xf32>
      %cst = arith.constant dense<0.000000e+00> : vector<32x32xf32>
      %16 = tpu.matmul %13, %13, %cst {dimension_numbers = #tpu.dot_dimension_numbers<[0], [0], [1], [1], [0, 1, 1, 1], [], []>} : vector<8x32xf32>, vector<8x32xf32>, vector<32x32xf32> -> vector<32x32xf32>
      %17 = arith.addf %15, %16 : vector<32x32xf32>
      %c0_10 = arith.constant 0 : index
      %c0_11 = arith.constant 0 : index
      %c0_12 = arith.constant 0 : index
      %18 = vector.load %arg3[%c0_10, %c0_11, %c0_12] : memref<1x32x32xf32, #tpu.memory_space<vmem>>, vector<1x32x32xf32>
      %19 = vector.shape_cast %18 : vector<1x32x32xf32> to vector<32x32xf32>
      %20 = vector.shape_cast %17 : vector<32x32xf32> to vector<1x32x32xf32>
      tpu.vector_store %arg3[%c0_10, %c0_11, %c0_12], %20 {strides = array<i32>} : memref<1x32x32xf32, #tpu.memory_space<vmem>>, vector<1x32x32xf32>,
      %c0_13 = arith.constant 0 : index
      %c0_14 = arith.constant 0 : index
      %c0_15 = arith.constant 0 : index
      %21 = vector.load %arg4[%c0_13, %c0_14, %c0_15] : memref<1x1x32xf32, #tpu.memory_space<vmem>>, vector<1x1x32xf32>
      %22 = vector.shape_cast %21 : vector<1x1x32xf32> to vector<1x32xf32>
      %cst_16 = arith.constant dense<0.000000e+00> : vector<32xf32>
      %23 = vector.multi_reduction <add>, %13, %cst_16 [0] : vector<8x32xf32> to vector<32xf32>
      %24 = vector.shape_cast %23 : vector<32xf32> to vector<1x32xf32>
      %25 = arith.addf %22, %24 : vector<1x32xf32>
      %c0_17 = arith.constant 0 : index
      %c0_18 = arith.constant 0 : index
      %c0_19 = arith.constant 0 : index
      %26 = vector.load %arg4[%c0_17, %c0_18, %c0_19] : memref<1x1x32xf32, #tpu.memory_space<vmem>>, vector<1x1x32xf32>
      %27 = vector.shape_cast %26 : vector<1x1x32xf32> to vector<1x32xf32>
      %28 = vector.shape_cast %25 : vector<1x32xf32> to vector<1x1x32xf32>
      tpu.vector_store %arg4[%c0_17, %c0_18, %c0_19], %28 {strides = array<i32>} : memref<1x1x32xf32, #tpu.memory_space<vmem>>, vector<1x1x32xf32>,
    } else {
    }
    %c8_i32_4 = arith.constant 8 : i32
    %10 = arith.cmpi slt, %6, %c8_i32_4 : i32
    %11 = arith.extui %10 : i1 to i32
    %c0_i32_5 = arith.constant 0 : i32
    %12 = arith.cmpi ne, %11, %c0_i32_5 : i32
    scf.if %12 {
      %c0 = arith.constant 0 : index
      %c0_6 = arith.constant 0 : index
      %13 = vector.load %arg2[%c0, %c0_6] : memref<8x32xf32, #tpu.memory_space<vmem>>, vector<8x32xf32>
      %14 = tpu.iota {dimensions = array<i32: 0>} : vector<8x32xi32>
      %15 = vector.broadcast %6 : i32 to vector<8x32xi32>
      %16 = arith.cmpi slt, %14, %15 : vector<8x32xi32>
      %cst = arith.constant 0.000000e+00 : f32
      %17 = vector.broadcast %cst : f32 to vector<8x32xf32>
      %18 = arith.select %16, %13, %17 : vector<8x32xi1>, vector<8x32xf32>
      %c0_7 = arith.constant 0 : index
      %c0_8 = arith.constant 0 : index
      %c0_9 = arith.constant 0 : index
      %19 = vector.load %arg3[%c0_7, %c0_8, %c0_9] : memref<1x32x32xf32, #tpu.memory_space<vmem>>, vector<1x32x32xf32>
      %20 = vector.shape_cast %19 : vector<1x32x32xf32> to vector<32x32xf32>
      %cst_10 = arith.constant dense<0.000000e+00> : vector<32x32xf32>
      %21 = tpu.matmul %18, %18, %cst_10 {dimension_numbers = #tpu.dot_dimension_numbers<[0], [0], [1], [1], [0, 1, 1, 1], [], []>} : vector<8x32xf32>, vector<8x32xf32>, vector<32x32xf32> -> vector<32x32xf32>
      %22 = arith.addf %20, %21 : vector<32x32xf32>
      %c0_11 = arith.constant 0 : index
      %c0_12 = arith.constant 0 : index
      %c0_13 = arith.constant 0 : index
      %23 = vector.load %arg3[%c0_11, %c0_12, %c0_13] : memref<1x32x32xf32, #tpu.memory_space<vmem>>, vector<1x32x32xf32>
      %24 = vector.shape_cast %23 : vector<1x32x32xf32> to vector<32x32xf32>
      %25 = vector.shape_cast %22 : vector<32x32xf32> to vector<1x32x32xf32>
      tpu.vector_store %arg3[%c0_11, %c0_12, %c0_13], %25 {strides = array<i32>} : memref<1x32x32xf32, #tpu.memory_space<vmem>>, vector<1x32x32xf32>,
      %c0_14 = arith.constant 0 : index
      %c0_15 = arith.constant 0 : index
      %c0_16 = arith.constant 0 : index
      %26 = vector.load %arg4[%c0_14, %c0_15, %c0_16] : memref<1x1x32xf32, #tpu.memory_space<vmem>>, vector<1x1x32xf32>
      %27 = vector.shape_cast %26 : vector<1x1x32xf32> to vector<1x32xf32>
      %cst_17 = arith.constant dense<0.000000e+00> : vector<32xf32>
      %28 = vector.multi_reduction <add>, %18, %cst_17 [0] : vector<8x32xf32> to vector<32xf32>
      %29 = vector.shape_cast %28 : vector<32xf32> to vector<1x32xf32>
      %30 = arith.addf %27, %29 : vector<1x32xf32>
      %c0_18 = arith.constant 0 : index
      %c0_19 = arith.constant 0 : index
      %c0_20 = arith.constant 0 : index
      %31 = vector.load %arg4[%c0_18, %c0_19, %c0_20] : memref<1x1x32xf32, #tpu.memory_space<vmem>>, vector<1x1x32xf32>
      %32 = vector.shape_cast %31 : vector<1x1x32xf32> to vector<1x32xf32>
      %33 = vector.shape_cast %30 : vector<1x32xf32> to vector<1x1x32xf32>
      tpu.vector_store %arg4[%c0_18, %c0_19, %c0_20], %33 {strides = array<i32>} : memref<1x1x32xf32, #tpu.memory_space<vmem>>, vector<1x1x32xf32>,
    } else {
    }
    return
  }
  func.func @transform_0(%arg0: i32, %arg1: i32) -> (i32, i32) {
    %c1_i32 = arith.constant 1 : i32
    %0 = arith.muli %arg0, %c1_i32 : i32
    %1 = arith.addi %0, %arg1 : i32
    %c0_i32 = arith.constant 0 : i32
    %2 = arith.minsi %1, %c0_i32 : i32
    %c0_i32_0 = arith.constant 0 : i32
    %c0_i32_1 = arith.constant 0 : i32
    return %2, %c0_i32_0 : i32, i32
  }
  func.func @transform_1(%arg0: i32, %arg1: i32) -> (i32, i32, i32) {
    %c0_i32 = arith.constant 0 : i32
    %c0_i32_0 = arith.constant 0 : i32
    %c0_i32_1 = arith.constant 0 : i32
    return %arg0, %c0_i32, %c0_i32_0 : i32, i32, i32
  }
  func.func @transform_2(%arg0: i32, %arg1: i32) -> (i32, i32, i32) {
    %c0_i32 = arith.constant 0 : i32
    %c0_i32_0 = arith.constant 0 : i32
    %c0_i32_1 = arith.constant 0 : i32
    return %arg0, %c0_i32, %c0_i32_0 : i32, i32, i32
  }
}

</mosaic_0001>

<llo_original>
// kernel: tpu_custom_call.1
$region0: #{tpu_custom_call.1}
  #allocation0 [shape = 'u32[]', space=smem, size = 0x4, offset = 0x4, fixed_abs, tag = 'smem constant byte address 0x4 - core index']
  #allocation1 [shape = 'u32[144,128]{1,0:T(1,128)}', space=vmem, size = 0x12000, scoped, tag = 'internal scratch']
  %s0 = inlined_call_operand.hbm [shape: f32[8,32], index: 0, kind: input, shape index: {}]
  %s1 = inlined_call_operand.hbm [shape: f32[1,32,32], index: 1, kind: output, shape index: {0}]
  %s2 = inlined_call_operand.hbm [shape: f32[1,1,32], index: 2, kind: output, shape index: {1}]
  %3 = xla_tuple %s1, %s2
  %s4 = sld [smem:[#allocation0]]
  $region38: #{tpu_custom_call.1} parent=0
    _
  %s6 = ssub.s32 1, %s4
  %s7 = scalar_select 0, %s6, %s4
  $region1: #{tpu_custom_call.1} parent=0
    #allocation2 [shape = 'u8[4096]{0}', space=vmem, size = 0x1000, scoped, tag = 'input window, operand 0, single buffered']
    #allocation3 [shape = 's32[1]{0}', space=sflag, size = 0x4, scoped, tag = 'scoped memory for tpu_custom_call.1']
    #allocation4 [shape = 's32[1]{0}', space=sflag, size = 0x4, scoped, tag = 'scoped memory for tpu_custom_call.1']
    #allocation5 [shape = 'u8[16384]{0}', space=vmem, size = 0x4000, scoped, tag = 'output window, operand 0, single buffered']
    #allocation6 [shape = 'u8[512]{0}', space=vmem, size = 0x400, scoped, tag = 'output window, operand 1, single buffered']
    #allocation7 [shape = 's32[1]{0}', space=sflag, size = 0x4, scoped, tag = 'scoped memory for tpu_custom_call.1']
    %8 = vsyncpa [#allocation3], 0
    %9 = vsyncpa [#allocation4], 0
    %10 = vsyncpa [#allocation7], 0
    // Predicated region
    $region2: #{tpu_custom_call.1} parent=1 // pred_check
      _
    $region3: #{tpu_custom_call.1} parent=1 // pred_check_branch
      %12 = sbr.rel (0) target = $region5
    $region4: #{tpu_custom_call.1} parent=1 // pred_region
      %s13 = sadd.s32 0, 0
      %p14 = scmp.lt.s32.totalorder %s13, 0
      %s15 = scalar_select %p14, %s13, 0
      %s17 = ssub.s32 128, 128
      %18 = vsyncadd [#allocation3], %s17
      %s19 = smul.addr %s15, 128
      %s20 = scalar_lea.hbm %s0, %s19
      %s22 = sshll.u32 [#allocation2], 4
      %s23 = int_to_ptr.vmem [resolvable:$true] %s22
      %25 = dma.hbm_to_vmem [thread:$0]  %s20, 128, %s23, [#allocation3]
    $region5: #{tpu_custom_call.1} parent=1 // pred_fallthru
      _
    // Predicated region
    $region6: #{tpu_custom_call.1} parent=1 // pred_check
      _
    $region7: #{tpu_custom_call.1} parent=1 // pred_check_branch
      %27 = sbr.rel (0) target = $region9
    $region8: #{tpu_custom_call.1} parent=1 // pred_region
      %28 = dma.done [#allocation3], 128
    $region9: #{tpu_custom_call.1} parent=1 // pred_fallthru
      _
    %s29 = sadd.s32 0, 0
    %p30 = scmp.lt.s32.totalorder %s29, 0
    %s31 = scalar_select %p30, %s29, 0
    %p32 = scmp.eq.s32.totalorder 0, 0
    // Predicated region
    $region10: #{tpu_custom_call.1} parent=1 // pred_check
      %p33 = pneg %p32
    $region11: #{tpu_custom_call.1} parent=1 // pred_check_branch
      %35 = sbr.rel (%p33) target = $region13
    $region12: #{tpu_custom_call.1} parent=1 // pred_region
      %vm36 = vcmask 261120
      %37 = vst.msk [vmem:[#allocation5] sm:$0xff] %vm36, 0.0
      %38 = vst.msk [vmem:[#allocation5 + $0x8] sm:$0xff] %vm36, 0.0
      %39 = vst.msk [vmem:[#allocation5 + $0x10] sm:$0xff] %vm36, 0.0
      %40 = vst.msk [vmem:[#allocation5 + $0x18] sm:$0xff] %vm36, 0.0
      %vm41 = vcmask 253952
      %42 = vst.msk [vmem:[#allocation6] sm:$0x1] %vm41, 0.0
    $region13: #{tpu_custom_call.1} parent=1 // pred_fallthru
      _
    %s43 = sadd.s32 0, 0
    %s44 = smul.u32 %s43, 8
    %s45 = ssub.s32 8, %s44
    %p46 = scmp.ge.s32.totalorder %s45, 8
    // Predicated region
    $region14: #{tpu_custom_call.1} parent=1 // pred_check
      %p47 = pneg %p46
    $region15: #{tpu_custom_call.1} parent=1 // pred_check_branch
      %49 = sbr.rel (%p47) target = $region17
    $region16: #{tpu_custom_call.1} parent=1 // pred_region
      %v50 = vld [vmem:[#allocation2] sm:$0xff]
      %v51 = vld [vmem:[#allocation5] sm:$0xff]
      %v52 = vld [vmem:[#allocation5 + $0x8] sm:$0xff]
      %v53 = vld [vmem:[#allocation5 + $0x10] sm:$0xff]
      %v54 = vld [vmem:[#allocation5 + $0x18] sm:$0xff]
      %55 = vxpose.xlu0.b32.start [1/16] %v50, 128
      %56 = vxpose.xlu0.b32.cont [2/16] 0.0, 128
      %57 = vxpose.xlu0.b32.cont [3/16] 0.0, 128
      %58 = vxpose.xlu0.b32.cont [4/16] 0.0, 128
      %59 = vxpose.xlu0.b32.cont [5/16] 0.0, 128
      %60 = vxpose.xlu0.b32.cont [6/16] 0.0, 128
      %61 = vxpose.xlu0.b32.cont [7/16] 0.0, 128
      %62 = vxpose.xlu0.b32.cont [8/16] 0.0, 128
      %63 = vxpose.xlu0.b32.cont [9/16] 0.0, 128
      %64 = vxpose.xlu0.b32.cont [10/16] 0.0, 128
      %65 = vxpose.xlu0.b32.cont [11/16] 0.0, 128
      %66 = vxpose.xlu0.b32.cont [12/16] 0.0, 128
      %67 = vxpose.xlu0.b32.cont [13/16] 0.0, 128
      %68 = vxpose.xlu0.b32.cont [14/16] 0.0, 128
      %69 = vxpose.xlu0.b32.cont [15/16] 0.0, 128
      %70 = vxpose.xlu0.b32.end [16/16] 0.0, 128
      %v71 = vpop.trf.xlu0
      %v72 = vpop.trf.xlu0
      %v73 = vpop.trf.xlu0
      %v74 = vpop.trf.xlu0
      %v75 = vpop.trf.xlu0
      %v76 = vpop.trf.xlu0
      %v77 = vpop.trf.xlu0
      %v78 = vpop.trf.xlu0
      %v79 = vpop.trf.xlu0
      %v80 = vpop.trf.xlu0
      %v81 = vpop.trf.xlu0
      %v82 = vpop.trf.xlu0
      %v83 = vpop.trf.xlu0
      %v84 = vpop.trf.xlu0
      %v85 = vpop.trf.xlu0
      %v86 = vpop.trf.xlu0
      %vm87 = vcmask 64512
      %v89 = vsel %vm87, %v71, 0
      %v92 = vsel %vm87, %v72, 0
      %v95 = vsel %vm87, %v73, 0
      %v98 = vsel %vm87, %v74, 0
      %100 = vmatprep.subr.mxu0 0.0
      %101 = vmatpush1.msra.mxu0 0.0
      %102 = vmatprep.subr.mxu0 0.0
      %103 = vmatpush1.msra.mxu0 0.0
      %104 = vmatprep.subr.mxu0 0.0
      %105 = vmatpush1.msra.mxu0 0.0
      %106 = vmatprep.subr.mxu0 0.0
      %107 = vmatpush1.msra.mxu0 0.0
      %108 = vmatprep.subr.mxu0 0.0
      %109 = vmatpush1.msra.mxu0 0.0
      %110 = vmatprep.subr.mxu0 0.0
      %111 = vmatpush1.msra.mxu0 0.0
      %112 = vmatprep.subr.mxu0 0.0
      %113 = vmatpush1.msra.mxu0 0.0
      %114 = vmatprep.subr.mxu0 0.0
      %115 = vmatpush1.msra.mxu0 0.0
      %116 = vmatprep.subr.mxu0 0.0
      %117 = vmatpush1.msra.mxu0 0.0
      %118 = vmatprep.subr.mxu0 0.0
      %119 = vmatpush1.msra.mxu0 0.0
      %120 = vmatprep.subr.mxu0 0.0
      %121 = vmatpush1.msra.mxu0 0.0
      %122 = vmatprep.subr.mxu0 0.0
      %123 = vmatpush1.msra.mxu0 0.0
      %124 = vmatprep.subr.mxu0 0.0
      %125 = vmatpush1.msra.mxu0 0.0
      %126 = vmatprep.subr.mxu0 0.0
      %127 = vmatpush1.msra.mxu0 0.0
      %128 = vmatprep.subr.mxu0 0.0
      %129 = vmatpush1.msra.mxu0 0.0
      %130 = vmatprep.subr.mxu0 0.0
      %131 = vmatpush1.msra.mxu0 %v50
      %132 = vmatprep.subr.mxu0 0.0
      %133 = vmatpush2.msra.mxu0 0.0
      %134 = vmatprep.subr.mxu0 0.0
      %135 = vmatpush2.msra.mxu0 0.0
      %136 = vmatprep.subr.mxu0 0.0
      %137 = vmatpush2.msra.mxu0 0.0
      %138 = vmatprep.subr.mxu0 0.0
      %139 = vmatpush2.msra.mxu0 0.0
      %140 = vmatprep.subr.mxu0 0.0
      %141 = vmatpush2.msra.mxu0 0.0
      %142 = vmatprep.subr.mxu0 0.0
      %143 = vmatpush2.msra.mxu0 0.0
      %144 = vmatprep.subr.mxu0 0.0
      %145 = vmatpush2.msra.mxu0 0.0
      %146 = vmatprep.subr.mxu0 0.0
      %147 = vmatpush2.msra.mxu0 0.0
      %148 = vmatprep.subr.mxu0 0.0
      %149 = vmatpush2.msra.mxu0 0.0
      %150 = vmatprep.subr.mxu0 0.0
      %151 = vmatpush2.msra.mxu0 0.0
      %152 = vmatprep.subr.mxu0 0.0
      %153 = vmatpush2.msra.mxu0 0.0
      %154 = vmatprep.subr.mxu0 0.0
      %155 = vmatpush2.msra.mxu0 0.0
      %156 = vmatprep.subr.mxu0 0.0
      %157 = vmatpush2.msra.mxu0 0.0
      %158 = vmatprep.subr.mxu0 0.0
      %159 = vmatpush2.msra.mxu0 0.0
      %160 = vmatprep.subr.mxu0 0.0
      %161 = vmatpush2.msra.mxu0 0.0
      %162 = vmatprep.subr.mxu0 0.0
      %163 = vmatpush2.msra.mxu0 0.0
      %164 = vmatprep.mubr.f32.mxu0 0.0
      %165 = vmatmul.mubr.f32.gmra.mxu0 %v89
      %v166 = vpop.f32.mrf.mxu0
      %v167 = vadd.f32 0.0, %v166
      %v168 = vpop.f32.mrf.mxu0
      %169 = vmatprep.mubr.f32.mxu0 0.0
      %170 = vmatmul.mubr.f32.gmra.mxu0 %v92
      %v171 = vpop.f32.mrf.mxu0
      %v172 = vadd.f32 0.0, %v171
      %v173 = vpop.f32.mrf.mxu0
      %174 = vmatprep.mubr.f32.mxu0 0.0
      %175 = vmatmul.mubr.f32.gmra.mxu0 %v95
      %v176 = vpop.f32.mrf.mxu0
      %v177 = vadd.f32 0.0, %v176
      %v178 = vpop.f32.mrf.mxu0
      %179 = vmatprep.mubr.f32.mxu0 0.0
      %180 = vmatmul.mubr.f32.gmra.mxu0 %v98
      %v181 = vpop.f32.mrf.mxu0
      %v182 = vadd.f32 0.0, %v181
      %v183 = vpop.f32.mrf.mxu0
      %184 = vdwg.mxu0
      %v185 = vadd.f32 %v51, %v167
      %v186 = vadd.f32 %v52, %v172
      %v187 = vadd.f32 %v53, %v177
      %v188 = vadd.f32 %v54, %v182
      %vm189 = vcmask 261120
      %190 = vst.msk [vmem:[#allocation5] sm:$0xff] %vm189, %v185
      %191 = vst.msk [vmem:[#allocation5 + $0x8] sm:$0xff] %vm189, %v186
      %192 = vst.msk [vmem:[#allocation5 + $0x10] sm:$0xff] %vm189, %v187
      %193 = vst.msk [vmem:[#allocation5 + $0x18] sm:$0xff] %vm189, %v188
      %v194 = vld [vmem:[#allocation6] sm:$0x1]
      %v195 = vsel %vm189, %v50, 0.0
      %v196 = vrot.slane %v195, 4
      %v197 = vadd.f32 %v195, %v196
      %v198 = vrot.slane %v197, 2
      %v199 = vadd.f32 %v197, %v198
      %v200 = vrot.slane %v199, 1
      %v201 = vadd.f32 %v199, %v200
      %v202 = vadd.f32 %v194, %v201
      %vm203 = vcmask 253952
      %204 = vst.msk [vmem:[#allocation6] sm:$0x1] %vm203, %v202
    $region17: #{tpu_custom_call.1} parent=1 // pred_fallthru
      _
    %p205 = scmp.lt.s32.totalorder %s45, 8
    // Predicated region
    $region18: #{tpu_custom_call.1} parent=1 // pred_check
      %p206 = pneg %p205
    $region19: #{tpu_custom_call.1} parent=1 // pred_check_branch
      %208 = sbr.rel (%p206) target = $region21
    $region20: #{tpu_custom_call.1} parent=1 // pred_region
      %v209 = vld [vmem:[#allocation2] sm:$0xff]
      %v210 = vlaneseq
      %v211 = vshrl.u32 %v210, 7
      %v212 = vstv %s45
      %vm213 = vcmp.lt.s32.totalorder %v211, %v212
      %v214 = vsel %vm213, %v209, 0.0
      %v215 = vld [vmem:[#allocation5] sm:$0xff]
      %v216 = vld [vmem:[#allocation5 + $0x8] sm:$0xff]
      %v217 = vld [vmem:[#allocation5 + $0x10] sm:$0xff]
      %v218 = vld [vmem:[#allocation5 + $0x18] sm:$0xff]
      %219 = vxpose.xlu0.b32.start [1/16] %v214, 128
      %220 = vxpose.xlu0.b32.cont [2/16] 0.0, 128
      %221 = vxpose.xlu0.b32.cont [3/16] 0.0, 128
      %222 = vxpose.xlu0.b32.cont [4/16] 0.0, 128
      %223 = vxpose.xlu0.b32.cont [5/16] 0.0, 128
      %224 = vxpose.xlu0.b32.cont [6/16] 0.0, 128
      %225 = vxpose.xlu0.b32.cont [7/16] 0.0, 128
      %226 = vxpose.xlu0.b32.cont [8/16] 0.0, 128
      %227 = vxpose.xlu0.b32.cont [9/16] 0.0, 128
      %228 = vxpose.xlu0.b32.cont [10/16] 0.0, 128
      %229 = vxpose.xlu0.b32.cont [11/16] 0.0, 128
      %230 = vxpose.xlu0.b32.cont [12/16] 0.0, 128
      %231 = vxpose.xlu0.b32.cont [13/16] 0.0, 128
      %232 = vxpose.xlu0.b32.cont [14/16] 0.0, 128
      %233 = vxpose.xlu0.b32.cont [15/16] 0.0, 128
      %234 = vxpose.xlu0.b32.end [16/16] 0.0, 128
      %v235 = vpop.trf.xlu0
      %v236 = vpop.trf.xlu0
      %v237 = vpop.trf.xlu0
      %v238 = vpop.trf.xlu0
      %v239 = vpop.trf.xlu0
      %v240 = vpop.trf.xlu0
      %v241 = vpop.trf.xlu0
      %v242 = vpop.trf.xlu0
      %v243 = vpop.trf.xlu0
      %v244 = vpop.trf.xlu0
      %v245 = vpop.trf.xlu0
      %v246 = vpop.trf.xlu0
      %v247 = vpop.trf.xlu0
      %v248 = vpop.trf.xlu0
      %v249 = vpop.trf.xlu0
      %v250 = vpop.trf.xlu0
      %vm251 = vcmask 64512
      %v253 = vsel %vm251, %v235, 0
      %v256 = vsel %vm251, %v236, 0
      %v259 = vsel %vm251, %v237, 0
      %v262 = vsel %vm251, %v238, 0
      %264 = vmatprep.subr.mxu0 0.0
      %265 = vmatpush1.msra.mxu0 0.0
      %266 = vmatprep.subr.mxu0 0.0
      %267 = vmatpush1.msra.mxu0 0.0
      %268 = vmatprep.subr.mxu0 0.0
      %269 = vmatpush1.msra.mxu0 0.0
      %270 = vmatprep.subr.mxu0 0.0
      %271 = vmatpush1.msra.mxu0 0.0
      %272 = vmatprep.subr.mxu0 0.0
      %273 = vmatpush1.msra.mxu0 0.0
      %274 = vmatprep.subr.mxu0 0.0
      %275 = vmatpush1.msra.mxu0 0.0
      %276 = vmatprep.subr.mxu0 0.0
      %277 = vmatpush1.msra.mxu0 0.0
      %278 = vmatprep.subr.mxu0 0.0
      %279 = vmatpush1.msra.mxu0 0.0
      %280 = vmatprep.subr.mxu0 0.0
      %281 = vmatpush1.msra.mxu0 0.0
      %282 = vmatprep.subr.mxu0 0.0
      %283 = vmatpush1.msra.mxu0 0.0
      %284 = vmatprep.subr.mxu0 0.0
      %285 = vmatpush1.msra.mxu0 0.0
      %286 = vmatprep.subr.mxu0 0.0
      %287 = vmatpush1.msra.mxu0 0.0
      %288 = vmatprep.subr.mxu0 0.0
      %289 = vmatpush1.msra.mxu0 0.0
      %290 = vmatprep.subr.mxu0 0.0
      %291 = vmatpush1.msra.mxu0 0.0
      %292 = vmatprep.subr.mxu0 0.0
      %293 = vmatpush1.msra.mxu0 0.0
      %294 = vmatprep.subr.mxu0 0.0
      %295 = vmatpush1.msra.mxu0 %v214
      %296 = vmatprep.subr.mxu0 0.0
      %297 = vmatpush2.msra.mxu0 0.0
      %298 = vmatprep.subr.mxu0 0.0
      %299 = vmatpush2.msra.mxu0 0.0
      %300 = vmatprep.subr.mxu0 0.0
      %301 = vmatpush2.msra.mxu0 0.0
      %302 = vmatprep.subr.mxu0 0.0
      %303 = vmatpush2.msra.mxu0 0.0
      %304 = vmatprep.subr.mxu0 0.0
      %305 = vmatpush2.msra.mxu0 0.0
      %306 = vmatprep.subr.mxu0 0.0
      %307 = vmatpush2.msra.mxu0 0.0
      %308 = vmatprep.subr.mxu0 0.0
      %309 = vmatpush2.msra.mxu0 0.0
      %310 = vmatprep.subr.mxu0 0.0
      %311 = vmatpush2.msra.mxu0 0.0
      %312 = vmatprep.subr.mxu0 0.0
      %313 = vmatpush2.msra.mxu0 0.0
      %314 = vmatprep.subr.mxu0 0.0
      %315 = vmatpush2.msra.mxu0 0.0
      %316 = vmatprep.subr.mxu0 0.0
      %317 = vmatpush2.msra.mxu0 0.0
      %318 = vmatprep.subr.mxu0 0.0
      %319 = vmatpush2.msra.mxu0 0.0
      %320 = vmatprep.subr.mxu0 0.0
      %321 = vmatpush2.msra.mxu0 0.0
      %322 = vmatprep.subr.mxu0 0.0
      %323 = vmatpush2.msra.mxu0 0.0
      %324 = vmatprep.subr.mxu0 0.0
      %325 = vmatpush2.msra.mxu0 0.0
      %326 = vmatprep.subr.mxu0 0.0
      %327 = vmatpush2.msra.mxu0 0.0
      %328 = vmatprep.mubr.f32.mxu0 0.0
      %329 = vmatmul.mubr.f32.gmra.mxu0 %v253
      %v330 = vpop.f32.mrf.mxu0
      %v331 = vadd.f32 0.0, %v330
      %v332 = vpop.f32.mrf.mxu0
      %333 = vmatprep.mubr.f32.mxu0 0.0
      %334 = vmatmul.mubr.f32.gmra.mxu0 %v256
      %v335 = vpop.f32.mrf.mxu0
      %v336 = vadd.f32 0.0, %v335
      %v337 = vpop.f32.mrf.mxu0
      %338 = vmatprep.mubr.f32.mxu0 0.0
      %339 = vmatmul.mubr.f32.gmra.mxu0 %v259
      %v340 = vpop.f32.mrf.mxu0
      %v341 = vadd.f32 0.0, %v340
      %v342 = vpop.f32.mrf.mxu0
      %343 = vmatprep.mubr.f32.mxu0 0.0
      %344 = vmatmul.mubr.f32.gmra.mxu0 %v262
      %v345 = vpop.f32.mrf.mxu0
      %v346 = vadd.f32 0.0, %v345
      %v347 = vpop.f32.mrf.mxu0
      %348 = vdwg.mxu0
      %v349 = vadd.f32 %v215, %v331
      %v350 = vadd.f32 %v216, %v336
      %v351 = vadd.f32 %v217, %v341
      %v352 = vadd.f32 %v218, %v346
      %vm353 = vcmask 261120
      %354 = vst.msk [vmem:[#allocation5] sm:$0xff] %vm353, %v349
      %355 = vst.msk [vmem:[#allocation5 + $0x8] sm:$0xff] %vm353, %v350
      %356 = vst.msk [vmem:[#allocation5 + $0x10] sm:$0xff] %vm353, %v351
      %357 = vst.msk [vmem:[#allocation5 + $0x18] sm:$0xff] %vm353, %v352
      %v358 = vld [vmem:[#allocation6] sm:$0x1]
      %v359 = vsel %vm353, %v214, 0.0
      %v360 = vrot.slane %v359, 4
      %v361 = vadd.f32 %v359, %v360
      %v362 = vrot.slane %v361, 2
      %v363 = vadd.f32 %v361, %v362
      %v364 = vrot.slane %v363, 1
      %v365 = vadd.f32 %v363, %v364
      %v366 = vadd.f32 %v358, %v365
      %vm367 = vcmask 253952
      %368 = vst.msk [vmem:[#allocation6] sm:$0x1] %vm367, %v366
    $region21: #{tpu_custom_call.1} parent=1 // pred_fallthru
      _
    // Predicated region
    $region22: #{tpu_custom_call.1} parent=1 // pred_check
      _
    $region23: #{tpu_custom_call.1} parent=1 // pred_check_branch
      %370 = sbr.rel (0) target = $region25
    $region24: #{tpu_custom_call.1} parent=1 // pred_region
      %s372 = ssub.s32 512, 512
      %373 = vsyncadd [#allocation4], %s372
      %s374 = sshll.u32 [#allocation5], 4
      %s375 = int_to_ptr.vmem [resolvable:$true] %s374
      %380 = dma.vmem_to_hbm [thread:$0]  %s375, 512, %s1, [#allocation4], 128, 128, 8
    $region25: #{tpu_custom_call.1} parent=1 // pred_fallthru
      _
    // Predicated region
    $region26: #{tpu_custom_call.1} parent=1 // pred_check
      _
    $region27: #{tpu_custom_call.1} parent=1 // pred_check_branch
      %382 = sbr.rel (0) target = $region29
    $region28: #{tpu_custom_call.1} parent=1 // pred_region
      %s384 = ssub.s32 16, 16
      %385 = vsyncadd [#allocation7], %s384
      %s387 = sshll.u32 [#allocation6], 4
      %s388 = int_to_ptr.vmem [resolvable:$true] %s387
      %390 = dma.vmem_to_hbm [thread:$0]  %s388, 16, %s2, [#allocation7]
    $region29: #{tpu_custom_call.1} parent=1 // pred_fallthru
      _
    // Predicated region
    $region30: #{tpu_custom_call.1} parent=1 // pred_check
      _
    $region31: #{tpu_custom_call.1} parent=1 // pred_check_branch
      %392 = sbr.rel (0) target = $region33
    $region32: #{tpu_custom_call.1} parent=1 // pred_region
      %393 = dma.done [#allocation4], 512
    $region33: #{tpu_custom_call.1} parent=1 // pred_fallthru
      _
    // Predicated region
    $region34: #{tpu_custom_call.1} parent=1 // pred_check
      _
    $region35: #{tpu_custom_call.1} parent=1 // pred_check_branch
      %395 = sbr.rel (0) target = $region37
    $region36: #{tpu_custom_call.1} parent=1 // pred_region
      %396 = dma.done [#allocation7], 16
    $region37: #{tpu_custom_call.1} parent=1 // pred_fallthru
      _
    %397 = vsyncpa [#allocation3], 1
    %398 = vsyncpa [#allocation4], 1
    %399 = vsyncpa [#allocation7], 1

</llo_original>
